<compile_context>
chip_gen: v7x
topology: tpu7x:2x2x1
jax: 0.10.0
libtpu: 0.0.40
codegen_flags: <defaults>
</compile_context>

<pallas_src>
import functools

import jax
import jax.numpy as jnp
from jax.experimental import pallas as pl
from jax.experimental.pallas import tpu as pltpu

SMOOTH = 1.0
LANE = 128
# 2048 rows * 128 lanes * 4 B = 1 MiB per input block; 2 inputs x 2 pipeline
# buffers = 4 MiB VMEM -> safe on every generation while moving >=256 KiB of
# each input per grid step (amortizes the ~0.35 us per-step overhead).
DEFAULT_TILE_ROWS = 2048


def _fold(x, acc_rows):
    """Fold (R, 128) -> (acc_rows, 128) using only cross-vreg VALU adds."""
    r = x.shape[0]
    if r == acc_rows:
        return x
    return jnp.sum(x.reshape(r // acc_rows, acc_rows, x.shape[1]), axis=0)


def _dice_kernel(p_ref, t_ref, loss_ref, num_acc, den_acc, *,
                 rows_total, rows_per_tile, need_mask, acc_rows):
    rk = pl.program_id(1)  # reduction (row-tile) axis: innermost, "arbitrary"

    @pl.when(rk == 0)
    def _():
        num_acc[...] = jnp.zeros_like(num_acc)
        den_acc[...] = jnp.zeros_like(den_acc)

    p = p_ref[0].astype(jnp.float32)   # (R, 128)
    t = t_ref[0].astype(jnp.float32)

    if need_mask:
        # Last row-tile hangs over the end of the (ROWS, 128) view: zero the
        # invalid rows in-kernel instead of padding the tensors in HBM.
        row_ids = jax.lax.broadcasted_iota(jnp.int32, p.shape, 0) + rk * rows_per_tile
        valid = row_ids < rows_total
        p = jnp.where(valid, p, 0.0)
        t = jnp.where(valid, t, 0.0)

    # Hot loop: elementwise VALU only; cross-lane reduce deferred to finalize.
    num_acc[...] += _fold(p * t, acc_rows)
    den_acc[...] += _fold(p * p + t * t, acc_rows)   # p-power = 2

    @pl.when(rk == pl.num_programs(1) - 1)
    def _():
        num = jnp.sum(num_acc[...], axis=0, keepdims=True)      # (1, 128)
        den = jnp.sum(den_acc[...], axis=0, keepdims=True)
        num = jnp.sum(num, axis=1, keepdims=True) + SMOOTH      # (1, 1)
        den = jnp.sum(den, axis=1, keepdims=True) + SMOOTH
        loss = 1.0 - num / den                                  # (1, 1)
        loss_ref[0] = jnp.broadcast_to(loss, (1, LANE)).astype(loss_ref.dtype)


@functools.partial(jax.jit, static_argnames=("reduction", "tile_rows"))
def binary_dice_loss(predict, target, *, reduction="mean",
                     tile_rows=DEFAULT_TILE_ROWS):
    assert predict.shape[0] == target.shape[0], "batch size mismatch"
    assert tile_rows % 8 == 0, "tile_rows must be a multiple of 8"
    n = predict.shape[0]
    pred2d = predict.reshape(n, -1)
    targ2d = target.reshape(n, -1)
    m = pred2d.shape[1]

    # Lane-dense view (N, ROWS, 128).  Pad only if M is not a multiple of 128
    # (zero padding is sum-neutral for p=2); typical C*H*W sizes need no pad.
    lane_pad = (-m) % LANE
    if lane_pad:
        pred2d = jnp.pad(pred2d, ((0, 0), (0, lane_pad)))
        targ2d = jnp.pad(targ2d, ((0, 0), (0, lane_pad)))
    rows = (m + lane_pad) // LANE
    pred3d = pred2d.reshape(n, rows, LANE)
    targ3d = targ2d.reshape(n, rows, LANE)

    r_tile = rows if rows <= tile_rows else tile_rows
    grid_rows = pl.cdiv(rows, r_tile)
    need_mask = (rows % r_tile) != 0
    acc_rows = 8 if r_tile % 8 == 0 else r_tile

    kernel = functools.partial(
        _dice_kernel, rows_total=rows, rows_per_tile=r_tile,
        need_mask=need_mask, acc_rows=acc_rows)

    in_bytes = (pred3d.size * pred3d.dtype.itemsize
                + targ3d.size * targ3d.dtype.itemsize)
    cost = pl.CostEstimate(
        flops=5 * n * rows * LANE,
        transcendentals=0,
        bytes_accessed=in_bytes + n * LANE * 4)

    per_sample = pl.pallas_call(
        kernel,
        out_shape=jax.ShapeDtypeStruct((n, 1, LANE), jnp.float32),
        grid_spec=pltpu.PrefetchScalarGridSpec(
            num_scalar_prefetch=0,
            grid=(n, grid_rows),   # batch (parallel), reduction axis last
            in_specs=[
                pl.BlockSpec((1, r_tile, LANE), lambda b, rk: (b, rk, 0)),
                pl.BlockSpec((1, r_tile, LANE), lambda b, rk: (b, rk, 0)),
            ],
            out_specs=pl.BlockSpec((1, 1, LANE), lambda b, rk: (b, 0, 0)),
            scratch_shapes=[
                pltpu.VMEM((acc_rows, LANE), jnp.float32),
                pltpu.VMEM((acc_rows, LANE), jnp.float32),
            ],
        ),
        compiler_params=pltpu.CompilerParams(
            dimension_semantics=("parallel", "arbitrary"),
        ),
        cost_estimate=cost,
    )(pred3d, targ3d)

    loss = per_sample[:, 0, 0]
    if reduction == "mean":
        return jnp.mean(loss)
    elif reduction == "sum":
        return jnp.sum(loss)
    elif reduction == "none":
        return loss
    else:
        raise ValueError(f"Unexpected reduction {reduction}")


def _reference(predict, target, reduction="mean"):
    n = predict.shape[0]
    p = predict.reshape(n, -1).astype(jnp.float32)
    t = target.reshape(n, -1).astype(jnp.float32)
    num = jnp.sum(p * t, axis=1) + SMOOTH
    den = jnp.sum(p ** 2 + t ** 2, axis=1) + SMOOTH
    loss = 1.0 - num / den
    if reduction == "mean":
        return jnp.mean(loss)
    if reduction == "sum":
        return jnp.sum(loss)
    return loss


if __name__ == "__main__":
    key = jax.random.PRNGKey(0)
    k1, k2, k3, k4 = jax.random.split(key, 4)

    # NCHW inputs like the PyTorch module (sigmoid probs + binary mask).
    predict = jax.nn.sigmoid(jax.random.normal(k1, (2, 4, 16, 16), jnp.float32))
    target = (jax.random.uniform(k2, (2, 4, 16, 16)) > 0.5).astype(jnp.float32)
    loss = binary_dice_loss(predict, target)
    jax.block_until_ready(loss)
    ref = _reference(predict, target)
    assert jnp.allclose(loss, ref, atol=1e-5, rtol=1e-5), (loss, ref)

    # Exercise the multi-tile + ragged-last-tile (in-kernel mask) path.
    predict2 = jax.nn.sigmoid(jax.random.normal(k3, (2, 3, 24, 16), jnp.float32))
    target2 = (jax.random.uniform(k4, (2, 3, 24, 16)) > 0.5).astype(jnp.float32)
    loss2 = binary_dice_loss(predict2, target2, tile_rows=8)
    jax.block_until_ready(loss2)
    ref2 = _reference(predict2, target2)
    assert jnp.allclose(loss2, ref2, atol=1e-5, rtol=1e-5), (loss2, ref2)

    print("KERNEL_OK")
</pallas_src>

<mosaic_0001>
module attributes {stable_mosaic.version = 11 : i64} {
  func.func @_dice_kernel(%arg0: i32, %arg1: i32, %arg2: memref<1x8x128xf32, #tpu.memory_space<vmem>>, %arg3: memref<1x8x128xf32, #tpu.memory_space<vmem>>, %arg4: memref<1x1x128xf32, #tpu.memory_space<vmem>>, %arg5: memref<8x128xf32, #tpu.memory_space<vmem>>, %arg6: memref<8x128xf32, #tpu.memory_space<vmem>>) attributes {dimension_semantics = [#tpu.dimension_semantics<parallel>, #tpu.dimension_semantics<arbitrary>], iteration_bounds = array<i64: 2, 1>, scalar_prefetch = 0 : i64, scratch_operands = 2 : i64, tpu.core_type = #tpu.core_type<tc>, window_params = [{transform_indices = @transform_0, window_bounds = array<i64: 1, 8, 128>}, {transform_indices = @transform_1, window_bounds = array<i64: 1, 8, 128>}, {transform_indices = @transform_2, window_bounds = array<i64: 1, 1, 128>}]} {
    %c0_i32 = arith.constant 0 : i32
    %0 = arith.cmpi eq, %arg1, %c0_i32 : i32
    %1 = arith.extui %0 : i1 to i32
    %c0_i32_0 = arith.constant 0 : i32
    %2 = arith.cmpi ne, %1, %c0_i32_0 : i32
    scf.if %2 {
      %cst = arith.constant 0.000000e+00 : f32
      %20 = vector.broadcast %cst : f32 to vector<8x128xf32>
      %c0_16 = arith.constant 0 : index
      %c0_17 = arith.constant 0 : index
      %21 = vector.load %arg5[%c0_16, %c0_17] : memref<8x128xf32, #tpu.memory_space<vmem>>, vector<8x128xf32>
      tpu.vector_store %arg5[%c0_16, %c0_17], %20 {strides = array<i32>} : memref<8x128xf32, #tpu.memory_space<vmem>>, vector<8x128xf32>,
      %cst_18 = arith.constant 0.000000e+00 : f32
      %22 = vector.broadcast %cst_18 : f32 to vector<8x128xf32>
      %c0_19 = arith.constant 0 : index
      %c0_20 = arith.constant 0 : index
      %23 = vector.load %arg6[%c0_19, %c0_20] : memref<8x128xf32, #tpu.memory_space<vmem>>, vector<8x128xf32>
      tpu.vector_store %arg6[%c0_19, %c0_20], %22 {strides = array<i32>} : memref<8x128xf32, #tpu.memory_space<vmem>>, vector<8x128xf32>,
    } else {
    }
    %c0 = arith.constant 0 : index
    %c0_1 = arith.constant 0 : index
    %c0_2 = arith.constant 0 : index
    %3 = vector.load %arg2[%c0, %c0_1, %c0_2] : memref<1x8x128xf32, #tpu.memory_space<vmem>>, vector<1x8x128xf32>
    %4 = vector.shape_cast %3 : vector<1x8x128xf32> to vector<8x128xf32>
    %c0_3 = arith.constant 0 : index
    %c0_4 = arith.constant 0 : index
    %c0_5 = arith.constant 0 : index
    %5 = vector.load %arg3[%c0_3, %c0_4, %c0_5] : memref<1x8x128xf32, #tpu.memory_space<vmem>>, vector<1x8x128xf32>
    %6 = vector.shape_cast %5 : vector<1x8x128xf32> to vector<8x128xf32>
    %c0_6 = arith.constant 0 : index
    %c0_7 = arith.constant 0 : index
    %7 = vector.load %arg5[%c0_6, %c0_7] : memref<8x128xf32, #tpu.memory_space<vmem>>, vector<8x128xf32>
    %8 = arith.mulf %4, %6 : vector<8x128xf32>
    %9 = arith.addf %7, %8 : vector<8x128xf32>
    %c0_8 = arith.constant 0 : index
    %c0_9 = arith.constant 0 : index
    %10 = vector.load %arg5[%c0_8, %c0_9] : memref<8x128xf32, #tpu.memory_space<vmem>>, vector<8x128xf32>
    tpu.vector_store %arg5[%c0_8, %c0_9], %9 {strides = array<i32>} : memref<8x128xf32, #tpu.memory_space<vmem>>, vector<8x128xf32>,
    %c0_10 = arith.constant 0 : index
    %c0_11 = arith.constant 0 : index
    %11 = vector.load %arg6[%c0_10, %c0_11] : memref<8x128xf32, #tpu.memory_space<vmem>>, vector<8x128xf32>
    %12 = arith.mulf %4, %4 : vector<8x128xf32>
    %13 = arith.mulf %6, %6 : vector<8x128xf32>
    %14 = arith.addf %12, %13 : vector<8x128xf32>
    %15 = arith.addf %11, %14 : vector<8x128xf32>
    %c0_12 = arith.constant 0 : index
    %c0_13 = arith.constant 0 : index
    %16 = vector.load %arg6[%c0_12, %c0_13] : memref<8x128xf32, #tpu.memory_space<vmem>>, vector<8x128xf32>
    tpu.vector_store %arg6[%c0_12, %c0_13], %15 {strides = array<i32>} : memref<8x128xf32, #tpu.memory_space<vmem>>, vector<8x128xf32>,
    %c0_i32_14 = arith.constant 0 : i32
    %17 = arith.cmpi eq, %arg1, %c0_i32_14 : i32
    %18 = arith.extui %17 : i1 to i32
    %c0_i32_15 = arith.constant 0 : i32
    %19 = arith.cmpi ne, %18, %c0_i32_15 : i32
    scf.if %19 {
      %c0_16 = arith.constant 0 : index
      %c0_17 = arith.constant 0 : index
      %20 = vector.load %arg5[%c0_16, %c0_17] : memref<8x128xf32, #tpu.memory_space<vmem>>, vector<8x128xf32>
      %cst = arith.constant dense<0.000000e+00> : vector<128xf32>
      %21 = vector.multi_reduction <add>, %20, %cst [0] : vector<8x128xf32> to vector<128xf32>
      %22 = vector.shape_cast %21 : vector<128xf32> to vector<1x128xf32>
      %c0_18 = arith.constant 0 : index
      %c0_19 = arith.constant 0 : index
      %23 = vector.load %arg6[%c0_18, %c0_19] : memref<8x128xf32, #tpu.memory_space<vmem>>, vector<8x128xf32>
      %cst_20 = arith.constant dense<0.000000e+00> : vector<128xf32>
      %24 = vector.multi_reduction <add>, %23, %cst_20 [0] : vector<8x128xf32> to vector<128xf32>
      %25 = vector.shape_cast %24 : vector<128xf32> to vector<1x128xf32>
      %cst_21 = arith.constant dense<0.000000e+00> : vector<1xf32>
      %26 = vector.multi_reduction <add>, %22, %cst_21 [1] : vector<1x128xf32> to vector<1xf32>
      %27 = vector.shape_cast %26 : vector<1xf32> to vector<1x1xf32>
      %cst_22 = arith.constant 1.000000e+00 : f32
      %28 = vector.broadcast %cst_22 : f32 to vector<1x1xf32>
      %29 = arith.addf %27, %28 : vector<1x1xf32>
      %cst_23 = arith.constant dense<0.000000e+00> : vector<1xf32>
      %30 = vector.multi_reduction <add>, %25, %cst_23 [1] : vector<1x128xf32> to vector<1xf32>
      %31 = vector.shape_cast %30 : vector<1xf32> to vector<1x1xf32>
      %cst_24 = arith.constant 1.000000e+00 : f32
      %32 = vector.broadcast %cst_24 : f32 to vector<1x1xf32>
      %33 = arith.addf %31, %32 : vector<1x1xf32>
      %34 = arith.divf %29, %33 : vector<1x1xf32>
      %cst_25 = arith.constant 1.000000e+00 : f32
      %35 = vector.broadcast %cst_25 : f32 to vector<1x1xf32>
      %36 = arith.subf %35, %34 : vector<1x1xf32>
      %37 = vector.shape_cast %36 : vector<1x1xf32> to vector<1x1xf32>
      %38 = vector.broadcast %37 : vector<1x1xf32> to vector<1x128xf32>
      %c0_26 = arith.constant 0 : index
      %c0_27 = arith.constant 0 : index
      %c0_28 = arith.constant 0 : index
      %39 = vector.load %arg4[%c0_26, %c0_27, %c0_28] : memref<1x1x128xf32, #tpu.memory_space<vmem>>, vector<1x1x128xf32>
      %40 = vector.shape_cast %39 : vector<1x1x128xf32> to vector<1x128xf32>
      %41 = vector.shape_cast %38 : vector<1x128xf32> to vector<1x1x128xf32>
      tpu.vector_store %arg4[%c0_26, %c0_27, %c0_28], %41 {strides = array<i32>} : memref<1x1x128xf32, #tpu.memory_space<vmem>>, vector<1x1x128xf32>,
    } else {
    }
    return
  }
  func.func @transform_0(%arg0: i32, %arg1: i32) -> (i32, i32, i32) {
    %c0_i32 = arith.constant 0 : i32
    %c0_i32_0 = arith.constant 0 : i32
    return %arg0, %arg1, %c0_i32 : i32, i32, i32
  }
  func.func @transform_1(%arg0: i32, %arg1: i32) -> (i32, i32, i32) {
    %c0_i32 = arith.constant 0 : i32
    %c0_i32_0 = arith.constant 0 : i32
    return %arg0, %arg1, %c0_i32 : i32, i32, i32
  }
  func.func @transform_2(%arg0: i32, %arg1: i32) -> (i32, i32, i32) {
    %c0_i32 = arith.constant 0 : i32
    %c0_i32_0 = arith.constant 0 : i32
    %c0_i32_1 = arith.constant 0 : i32
    return %arg0, %c0_i32, %c0_i32_0 : i32, i32, i32
  }
}

</mosaic_0001>

<llo_original>
// kernel: binary_dice_loss.1
$region0: #{binary_dice_loss.1}
  #allocation0 [shape = 'u32[]', space=smem, size = 0x4, offset = 0x4, fixed_abs, tag = 'smem constant byte address 0x4 - core index']
  #allocation1 [shape = 'u32[144,128]{1,0:T(1,128)}', space=vmem, size = 0x12000, scoped, tag = 'internal scratch']
  #allocation2 [shape = 'f32[8,128]{1,0:T(8,128)}', space=vmem, size = 0x1000, scoped, tag = 'scratch operand']
  #allocation3 [shape = 'f32[8,128]{1,0:T(8,128)}', space=vmem, size = 0x1000, scoped, tag = 'scratch operand']
  %s0 = inlined_call_operand.vmem [shape: f32[2,8,128], index: 0, kind: input, shape index: {}]
  %s1 = inlined_call_operand.vmem [shape: f32[2,8,128], index: 1, kind: input, shape index: {}]
  %s2 = inlined_call_operand.vmem [shape: f32[2,1,128], index: 2, kind: output, shape index: {}]
  %s3 = sld [smem:[#allocation0]]
  $region49: #{binary_dice_loss.1} parent=0
    _
  %s5 = ssub.s32 1, %s3
  %s6 = scalar_select 0, %s5, %s3
  loop: start=0, step=1, limit=4
  $region2: #{binary_dice_loss.1} parent=0 // loop_pre_header
    _
  $region3: #{binary_dice_loss.1} parent=0 // loop_header
    %s8 = sphi 0, %s12
    %p9 = scmp.ge.s32.totalorder %s8, 4
    %s15 = sphi 0, %s27
    %s16 = sphi 0, %s23
    %s17 = sphi 0, %s15
    %s18 = sphi 0, %s16
    %s19 = sphi 0, %s17
    %s20 = sphi 0, %s18
    %s32 = sphi 0, %s34
    %s35 = sphi 0, %s32
    %s36 = sphi 0, %s35
    %s52 = sphi 0, %s36
    %s60 = sphi 0, %s62
    %s63 = sphi 0, %s60
    %s64 = sphi 0, %s63
    %s80 = sphi 0, %s64
    %s86 = sphi 0, %s88
    %s89 = sphi 0, %s86
    %s90 = sphi 0, %s89
    %s106 = sphi 0, %s90
  $region4: #{binary_dice_loss.1} parent=0 // loop_header_branch
    %11 = sbr.rel (%p9) target = $region8
  $region5: #{binary_dice_loss.1} parent=0 // loop_body
    %s13 = ssub.s32 %s8, 1
    %s14 = ssub.s32 %s8, 2
    %s21 = sadd.s32 1, %s16
    %p22 = scmp.ge.s32.totalorder %s21, 1
    %s23 = scalar_select %p22, 0, %s21
    %s24 = sadd.s32 1, %s15
    %s25 = scalar_select %p22, %s24, %s15
    %p26 = scmp.ge.s32.totalorder %s25, 2
    %s27 = scalar_select %p26, 0, %s25
    %s28 = ssub.s32 %s15, %s27
    %s29 = ssub.s32 %s16, %s23
    %s30 = sor.u32 %s28, %s29
    %p31 = scmp.eq.s32.totalorder %s30, 0
    %s33 = sadd.s32 %s32, 1
    %s34 = scalar_select %p31, %s32, %s33
    %p37 = pneg %p31
    %p38 = scmp.eq.s32.totalorder %s8, 1
    %p39 = por %p37, %p38
    %p40 = scmp.ne.s32.totalorder %s32, %s35
    %p41 = scmp.eq.s32.totalorder %s8, 0
    %p42 = por %p40, %p41
    %p43 = scmp.ne.s32.totalorder %s32, %s35
    %p44 = scmp.eq.s32.totalorder %s13, 1
    %p45 = por %p43, %p44
    %p46 = scmp.ne.s32.totalorder %s35, %s36
    %p47 = scmp.eq.s32.totalorder %s13, 0
    %p48 = por %p46, %p47
    %p49 = scmp.ne.s32.totalorder %s35, %s36
    %p50 = scmp.eq.s32.totalorder %s14, 1
    %p51 = por %p49, %p50
    %p53 = scmp.ne.s32.totalorder %s36, %s52
    %p54 = scmp.eq.s32.totalorder %s14, 0
    %p55 = por %p53, %p54
    %s56 = ssub.s32 %s15, %s27
    %s57 = ssub.s32 %s16, %s23
    %s58 = sor.u32 %s56, %s57
    %p59 = scmp.eq.s32.totalorder %s58, 0
    %s61 = sadd.s32 %s60, 1
    %s62 = scalar_select %p59, %s60, %s61
    %p65 = pneg %p59
    %p66 = scmp.eq.s32.totalorder %s8, 1
    %p67 = por %p65, %p66
    %p68 = scmp.ne.s32.totalorder %s60, %s63
    %p69 = scmp.eq.s32.totalorder %s8, 0
    %p70 = por %p68, %p69
    %p71 = scmp.ne.s32.totalorder %s60, %s63
    %p72 = scmp.eq.s32.totalorder %s13, 1
    %p73 = por %p71, %p72
    %p74 = scmp.ne.s32.totalorder %s63, %s64
    %p75 = scmp.eq.s32.totalorder %s13, 0
    %p76 = por %p74, %p75
    %p77 = scmp.ne.s32.totalorder %s63, %s64
    %p78 = scmp.eq.s32.totalorder %s14, 1
    %p79 = por %p77, %p78
    %p81 = scmp.ne.s32.totalorder %s64, %s80
    %p82 = scmp.eq.s32.totalorder %s14, 0
    %p83 = por %p81, %p82
    %s84 = ssub.s32 %s15, %s27
    %p85 = scmp.eq.s32.totalorder %s84, 0
    %s87 = sadd.s32 %s86, 1
    %s88 = scalar_select %p85, %s86, %s87
    %p91 = pneg %p85
    %p92 = scmp.eq.s32.totalorder %s8, 1
    %p93 = por %p91, %p92
    %p94 = scmp.ne.s32.totalorder %s86, %s89
    %p95 = scmp.eq.s32.totalorder %s8, 0
    %p96 = por %p94, %p95
    %p97 = scmp.ne.s32.totalorder %s86, %s89
    %p98 = scmp.eq.s32.totalorder %s13, 1
    %p99 = por %p97, %p98
    %p100 = scmp.ne.s32.totalorder %s89, %s90
    %p101 = scmp.eq.s32.totalorder %s13, 0
    %p102 = por %p100, %p101
    %p103 = scmp.ne.s32.totalorder %s89, %s90
    %p104 = scmp.eq.s32.totalorder %s14, 1
    %p105 = por %p103, %p104
    %p107 = scmp.ne.s32.totalorder %s90, %s106
    %p108 = scmp.eq.s32.totalorder %s14, 0
    %p109 = por %p107, %p108
    %p110 = scmp.le.s32.totalorder 1, %s8
    %p111 = scmp.lt.s32.totalorder %s8, 3
    %p112 = pnand %p110, %p111
    %p113 = pneg %p112
    // Predicated region
    $region9: #{binary_dice_loss.1} parent=5 // pred_check
      _
    $region10: #{binary_dice_loss.1} parent=5 // pred_check_branch
      %115 = sbr.rel (%p112) target = $region12
    $region11: #{binary_dice_loss.1} parent=5 // pred_region
      %s116 = ssub.s32 %s8, 1
    $region12: #{binary_dice_loss.1} parent=5 // pred_fallthru
      _
    %p117 = scmp.lt.s32.totalorder %s8, 2
    // Predicated region
    $region13: #{binary_dice_loss.1} parent=5 // pred_check
      %p118 = pneg %p117
    $region14: #{binary_dice_loss.1} parent=5 // pred_check_branch
      %120 = sbr.rel (%p118) target = $region16
    $region15: #{binary_dice_loss.1} parent=5 // pred_region
      // Predicated region
      $region17: #{binary_dice_loss.1} parent=15 // pred_check
        %p121 = pneg %p42
      $region18: #{binary_dice_loss.1} parent=15 // pred_check_branch
        %123 = sbr.rel (%p121) target = $region20
      $region19: #{binary_dice_loss.1} parent=15 // pred_region
        %p124 = scmp.lt.s32.totalorder %s15, 1
        %s125 = scalar_select %p124, %s15, 1
        %p126 = scmp.lt.s32.totalorder %s16, 0
        %s127 = scalar_select %p126, %s16, 0
        %s128 = sadd.s32 %s127, %s125
        %s129 = smul.addr %s128, 8
        %s130 = scalar_lea.vmem %s0, %s129
      $region20: #{binary_dice_loss.1} parent=15 // pred_fallthru
        _
      // Predicated region
      $region21: #{binary_dice_loss.1} parent=15 // pred_check
        %p131 = pneg %p70
      $region22: #{binary_dice_loss.1} parent=15 // pred_check_branch
        %133 = sbr.rel (%p131) target = $region24
      $region23: #{binary_dice_loss.1} parent=15 // pred_region
        %p134 = scmp.lt.s32.totalorder %s15, 1
        %s135 = scalar_select %p134, %s15, 1
        %p136 = scmp.lt.s32.totalorder %s16, 0
        %s137 = scalar_select %p136, %s16, 0
        %s138 = sadd.s32 %s137, %s135
        %s139 = smul.addr %s138, 8
        %s140 = scalar_lea.vmem %s1, %s139
      $region24: #{binary_dice_loss.1} parent=15 // pred_fallthru
        _
    $region16: #{binary_dice_loss.1} parent=5 // pred_fallthru
      _
    %p141 = scmp.le.s32.totalorder 1, %s8
    %p142 = scmp.lt.s32.totalorder %s8, 3
    %p143 = pnand %p141, %p142
    %p144 = pneg %p143
    // Predicated region
    $region25: #{binary_dice_loss.1} parent=5 // pred_check
      _
    $region26: #{binary_dice_loss.1} parent=5 // pred_check_branch
      %146 = sbr.rel (%p143) target = $region28
    $region27: #{binary_dice_loss.1} parent=5 // pred_region
      %s147 = ssub.s32 %s8, 1
      %p148 = scmp.lt.s32.totalorder %s17, 1
      %s149 = scalar_select %p148, %s17, 1
      %p150 = scmp.lt.s32.totalorder %s18, 0
      %s151 = scalar_select %p150, %s18, 0
      %s152 = sadd.s32 %s151, %s149
      %s153 = smul.addr %s152, 8
      %s154 = scalar_lea.vmem %s0, %s153
      %p155 = pneg %p48
      %p156 = pneg %p45
      %p157 = scmp.lt.s32.totalorder %s17, 1
      %s158 = scalar_select %p157, %s17, 1
      %p159 = scmp.lt.s32.totalorder %s18, 0
      %s160 = scalar_select %p159, %s18, 0
      %s161 = sadd.s32 %s160, %s158
      %s162 = smul.addr %s161, 8
      %s163 = scalar_lea.vmem %s1, %s162
      %p164 = pneg %p76
      %p165 = pneg %p73
      %p166 = pneg %p102
      %p167 = pneg %p99
      %p168 = scmp.lt.s32.totalorder %s17, 1
      %s169 = scalar_select %p168, %s17, 1
      %s170 = scalar_lea.vmem %s2, %s169
      %p171 = scmp.lt.s32.totalorder %s17, 1
      %s172 = scalar_select %p171, %s17, 1
      %p173 = scmp.lt.s32.totalorder %s18, 0
      %s174 = scalar_select %p173, %s18, 0
      %s175 = sadd.s32 %s174, %s172
      %s176 = smul.addr %s175, 8
      %s177 = scalar_lea.vmem %s0, %s176
      %p178 = scmp.lt.s32.totalorder %s17, 1
      %s179 = scalar_select %p178, %s17, 1
      %p180 = scmp.lt.s32.totalorder %s18, 0
      %s181 = scalar_select %p180, %s18, 0
      %s182 = sadd.s32 %s181, %s179
      %s183 = smul.addr %s182, 8
      %s184 = scalar_lea.vmem %s1, %s183
      %p185 = scmp.lt.s32.totalorder %s17, 1
      %s186 = scalar_select %p185, %s17, 1
      %s187 = scalar_lea.vmem %s2, %s186
      %p188 = scmp.eq.s32.totalorder %s18, 0
      // Predicated region
      $region29: #{binary_dice_loss.1} parent=27 // pred_check
        %p189 = pneg %p188
      $region30: #{binary_dice_loss.1} parent=27 // pred_check_branch
        %191 = sbr.rel (%p189) target = $region32
      $region31: #{binary_dice_loss.1} parent=27 // pred_region
        %192 = vst [vmem:[#allocation2] sm:$0xff] 0.0
        %193 = vst [vmem:[#allocation3] sm:$0xff] 0.0
      $region32: #{binary_dice_loss.1} parent=27 // pred_fallthru
        _
      %v194 = vld [vmem:[%s177] sm:$0xff]
      %v195 = vld [vmem:[%s184] sm:$0xff]
      %v196 = vld [vmem:[#allocation2] sm:$0xff]
      %v197 = vmul.f32 %v194, %v195
      %v198 = vadd.f32 %v196, %v197
      %199 = vst [vmem:[#allocation2] sm:$0xff] %v198
      %v200 = vld [vmem:[#allocation3] sm:$0xff]
      %v201 = vmul.f32 %v194, %v194
      %v202 = vmul.f32 %v195, %v195
      %v203 = vadd.f32 %v201, %v202
      %v204 = vadd.f32 %v200, %v203
      %205 = vst [vmem:[#allocation3] sm:$0xff] %v204
      // Predicated region
      $region33: #{binary_dice_loss.1} parent=27 // pred_check
        %p206 = pneg %p188
      $region34: #{binary_dice_loss.1} parent=27 // pred_check_branch
        %208 = sbr.rel (%p206) target = $region36
      $region35: #{binary_dice_loss.1} parent=27 // pred_region
        %v209 = vld [vmem:[#allocation2] sm:$0xff]
        %v210 = vrot.slane %v209, 4
        %v211 = vadd.f32 %v209, %v210
        %v212 = vrot.slane %v211, 2
        %v213 = vadd.f32 %v211, %v212
        %v214 = vrot.slane %v213, 1
        %v215 = vadd.f32 %v213, %v214
        %v216 = vld [vmem:[#allocation3] sm:$0xff]
        %v217 = vrot.slane %v216, 4
        %v218 = vadd.f32 %v216, %v217
        %v219 = vrot.slane %v218, 2
        %v220 = vadd.f32 %v218, %v219
        %v221 = vrot.slane %v220, 1
        %v222 = vadd.f32 %v220, %v221
        %223 = vadd.xlane.f32.xlu0 %v215
        %v224 = vpop.xlane.xlu0 %223
        %v225 = vadd.f32 %v224, 1.0
        %226 = vadd.xlane.f32.xlu0 %v222
        %v227 = vpop.xlane.xlu0 %226
        %v228 = vadd.f32 %v227, 1.0
        %v229 = vrcp.pop %v228
        %v230 = vmul.f32 %v225, %v229
        %v231 = vsub.f32 1.0, %v230
        %232 = vst [vmem:[%s187] sm:$0x1] %v231
      $region36: #{binary_dice_loss.1} parent=27 // pred_fallthru
        _
      %p233 = scmp.lt.s32.totalorder %s17, 1
      %s234 = scalar_select %p233, %s17, 1
      %s235 = scalar_lea.vmem %s2, %s234
      // Predicated region
      $region37: #{binary_dice_loss.1} parent=27 // pred_check
        %p236 = pneg %p99
      $region38: #{binary_dice_loss.1} parent=27 // pred_check_branch
        %238 = sbr.rel (%p236) target = $region40
      $region39: #{binary_dice_loss.1} parent=27 // pred_region
        _
      $region40: #{binary_dice_loss.1} parent=27 // pred_fallthru
        _
    $region28: #{binary_dice_loss.1} parent=5 // pred_fallthru
      _
    %p239 = scmp.le.s32.totalorder 2, %s8
    // Predicated region
    $region41: #{binary_dice_loss.1} parent=5 // pred_check
      %p240 = pneg %p239
    $region42: #{binary_dice_loss.1} parent=5 // pred_check_branch
      %242 = sbr.rel (%p240) target = $region44
    $region43: #{binary_dice_loss.1} parent=5 // pred_region
      %s243 = ssub.s32 %s8, 2
      // Predicated region
      $region45: #{binary_dice_loss.1} parent=43 // pred_check
        %p244 = pneg %p105
      $region46: #{binary_dice_loss.1} parent=43 // pred_check_branch
        %246 = sbr.rel (%p244) target = $region48
      $region47: #{binary_dice_loss.1} parent=43 // pred_region
        %p247 = scmp.lt.s32.totalorder %s19, 1
        %s248 = scalar_select %p247, %s19, 1
        %s249 = scalar_lea.vmem %s2, %s248
      $region48: #{binary_dice_loss.1} parent=43 // pred_fallthru
        _
    $region44: #{binary_dice_loss.1} parent=5 // pred_fallthru
      _
  $region6: #{binary_dice_loss.1} parent=0 // loop_footer
    %s12 = sadd.s32 1, %s8
  $region7: #{binary_dice_loss.1} parent=0 // loop_footer_branch
    %7 = sbr.rel target = $region3
  $region8: #{binary_dice_loss.1} parent=0 // loop_exit
    _

</llo_original>
